<compile_context>
chip_gen: v6e
topology: v6e:2x2x1
jax: 0.10.0
libtpu: 0.0.40
codegen_flags: <defaults>
</compile_context>

<pallas_src>
import functools
import numpy as np
import jax
import jax.numpy as jnp
from jax.experimental import pallas as pl
from jax.experimental.pallas import tpu as pltpu


# ----------------------------- in-kernel math -----------------------------

def _softplus(x):
    # matches torch.nn.functional.softplus (beta=1, threshold=20)
    return jnp.where(x > 20.0, x, jnp.log1p(jnp.exp(jnp.minimum(x, 20.0))))


def _sigmoid(x):
    # EUP-friendly form (tanh) instead of 1/(1+exp(-x)) VALU divide
    return 0.5 * jnp.tanh(0.5 * x) + 0.5


# ------------------------------- kernel ------------------------------------

def dmaq_si_weight_kernel(s_ref, a_ref, ws_ref, wa_ref, b_ref, sel_ref, out_ref,
                          *, ka, abs_weights):
    # One fused MXU matmul over all three head groups for the state input (+ bias) ...
    y = jnp.dot(s_ref[...], ws_ref[...],
                preferred_element_type=jnp.float32) + b_ref[...]        # (tb, 3*K*A)
    # ... plus the action-row contribution for the action heads.
    y_act = jnp.dot(a_ref[...], wa_ref[...],
                    preferred_element_type=jnp.float32)                 # (tb, K*A)

    keys = y[:, 0 * ka:1 * ka]      # agent-broadcast key heads (columns pre-repeated)
    ag   = y[:, 1 * ka:2 * ka]
    ac   = y[:, 2 * ka:3 * ka] + y_act

    if abs_weights:
        x_key = _softplus(keys) + 1e-10
    else:
        x_key = keys + 1e-10
    prod = x_key * _sigmoid(ag) * _sigmoid(ac)                          # (tb, K*A)

    # Sum over heads via a constant 0/1 selection matmul; the selector is zero-padded
    # to a full 128-lane width so this store is an unmasked full-lane vst.
    out_ref[...] = jnp.dot(prod, sel_ref[...], preferred_element_type=jnp.float32)


# --------------------------- parameter packing ------------------------------

def pack_params(params, *, n_agents, num_kernel, state_dim, dtype):
    """Fuse the 3*K linear heads into a state-weight (S, 3*K*A), an action-weight
    (AD, K*A), one f32 bias row (1, 3*K*A), and a lane-padded head-sum selector."""
    A, K = n_agents, num_kernel
    ka = K * A

    # Key heads: repeat each key column A times so their outputs come out
    # agent-broadcast (3*K*A << 128 lanes, so the extra columns are free on the MXU).
    w_key_rep = jnp.repeat(params["w_key"], A, axis=1)                  # (S, K*A)
    b_key_rep = jnp.repeat(params["b_key"], A, axis=1)                  # (1, K*A)

    w_action_s = params["w_action"][:state_dim]                         # (S,  K*A)
    w_action_a = params["w_action"][state_dim:]                         # (AD, K*A)

    w_s = jnp.concatenate([w_key_rep, params["w_agents"], w_action_s],
                          axis=1).astype(dtype)                         # (S, 3*K*A)
    w_a = w_action_a.astype(dtype)                                      # (AD, K*A)
    b_all = jnp.concatenate([b_key_rep, params["b_agents"], params["b_action"]],
                            axis=1).astype(jnp.float32)                 # (1, 3*K*A)

    # Head-sum selector, zero-padded to a full 128-lane output width:
    #   sel[k*A + a, a'] = 1 iff a == a'
    out_cols = 128 * ((A + 127) // 128)
    sel = jnp.zeros((ka, out_cols), jnp.float32)
    sel = sel.at[:, :A].set(jnp.tile(jnp.eye(A, dtype=jnp.float32), (K, 1)))
    return w_s, w_a, b_all, sel


# ------------------------------- wrapper ----------------------------------

def dmaq_si_weight(states, actions, params, *, n_agents, n_actions, num_kernel,
                   tb=None, activation_dtype=jnp.bfloat16, abs_weights=True):
    """states: (..., state_dim), actions: (..., n_agents*n_actions) -> (B, n_agents)."""
    state_dim = params["w_key"].shape[0]
    action_dim = n_agents * n_actions
    ka = num_kernel * n_agents

    states = states.reshape(-1, state_dim)
    actions = actions.reshape(-1, action_dim)
    B = states.shape[0]

    # bf16 streaming of activations; in-kernel math stays f32 via the MXU accumulator.
    s = states.astype(activation_dtype)
    a = actions.astype(activation_dtype)

    w_s, w_a, b_all, sel = pack_params(
        params, n_agents=n_agents, num_kernel=num_kernel,
        state_dim=state_dim, dtype=activation_dtype)
    out_cols = sel.shape[1]

    # Tile/grid policy: >= 2 pipelined blocks once B >= 512 (also shards the batch
    # across v7x's two TensorCores); 2048-row tiles for large B. Per-tile pipelined
    # VMEM footprint at tb=2048 is ~5 MiB -> fits every generation's default budget.
    if tb is None:
        if B < 512:
            tb = B
        else:
            tb = min(2048, max(256, (B // 4) // 256 * 256))
    grid = (pl.cdiv(B, tb),)          # ragged last block handled by Pallas (no jnp.pad)

    const = lambda arr: pl.BlockSpec(arr.shape, lambda i: (0, 0))   # grid-invariant

    kernel = functools.partial(dmaq_si_weight_kernel, ka=ka, abs_weights=abs_weights)

    out = pl.pallas_call(
        kernel,
        out_shape=jax.ShapeDtypeStruct((B, out_cols), jnp.float32),
        grid_spec=pltpu.PrefetchScalarGridSpec(
            num_scalar_prefetch=0,
            grid=grid,
            in_specs=[
                pl.BlockSpec((tb, state_dim), lambda i: (i, 0)),    # states tile
                pl.BlockSpec((tb, action_dim), lambda i: (i, 0)),   # actions tile
                const(w_s), const(w_a), const(b_all), const(sel),
            ],
            out_specs=pl.BlockSpec((tb, out_cols), lambda i: (i, 0)),
        ),
        compiler_params=pltpu.CompilerParams(
            dimension_semantics=("parallel",)),
    )(s, a, w_s, w_a, b_all, sel)

    return out[:, :n_agents]


# ---------------------- deterministic parameter init ----------------------

def init_params(key, *, state_dim, n_agents, n_actions, num_kernel):
    """Xavier-normal weights, zero bias, stored (in, out) with heads along columns."""
    action_dim = n_agents * n_actions
    sa_dim = state_dim + action_dim

    def xavier(k, fan_in, fan_out):
        std = float(np.sqrt(2.0 / (fan_in + fan_out)))
        # torch stores (out, in); generate that then transpose to (in, out)
        return (jax.random.normal(k, (fan_out, fan_in), jnp.float32) * std).T

    keys = jax.random.split(key, 3 * num_kernel)
    w_key = jnp.concatenate([xavier(keys[3 * i + 0], state_dim, 1)
                             for i in range(num_kernel)], axis=1)            # (S, K)
    w_agents = jnp.concatenate([xavier(keys[3 * i + 1], state_dim, n_agents)
                                for i in range(num_kernel)], axis=1)         # (S, K*A)
    w_action = jnp.concatenate([xavier(keys[3 * i + 2], sa_dim, n_agents)
                                for i in range(num_kernel)], axis=1)         # (SA, K*A)
    return {
        "w_key": w_key,       "b_key": jnp.zeros((1, num_kernel), jnp.float32),
        "w_agents": w_agents, "b_agents": jnp.zeros((1, num_kernel * n_agents), jnp.float32),
        "w_action": w_action, "b_action": jnp.zeros((1, num_kernel * n_agents), jnp.float32),
    }


# ----------------------------- pure-JAX reference --------------------------

def reference(states, actions, params, *, n_agents, n_actions, num_kernel):
    """Direct transcription of the PyTorch forward (per-head loop, unfused)."""
    state_dim = params["w_key"].shape[0]
    action_dim = n_agents * n_actions
    s = states.reshape(-1, state_dim)
    a = actions.reshape(-1, action_dim)
    d = jnp.concatenate([s, a], axis=1)
    keys = s @ params["w_key"] + params["b_key"]
    ag = s @ params["w_agents"] + params["b_agents"]
    ac = d @ params["w_action"] + params["b_action"]
    out = 0.0
    for k in range(num_kernel):
        x_key = jax.nn.softplus(keys[:, k:k + 1]) + 1e-10
        x_ag = jax.nn.sigmoid(ag[:, k * n_agents:(k + 1) * n_agents])
        x_ac = jax.nn.sigmoid(ac[:, k * n_agents:(k + 1) * n_agents])
        out = out + x_key * x_ag * x_ac
    return out


# --------------------------------- main ------------------------------------

if __name__ == "__main__":
    n_agents, n_actions = 4, 5
    state_dim, num_kernel = 16, 4
    bs, seq = 2, 8                                   # flattened batch B = 16

    root = jax.random.PRNGKey(0)
    k_p, k_s, k_a = jax.random.split(root, 3)

    params = init_params(k_p, state_dim=state_dim, n_agents=n_agents,
                         n_actions=n_actions, num_kernel=num_kernel)

    states = jax.random.normal(k_s, (bs, seq, state_dim), jnp.float32)
    actions = jax.random.uniform(k_a, (bs, seq, n_agents, n_actions), jnp.float32)

    out = dmaq_si_weight(states, actions, params,
                         n_agents=n_agents, n_actions=n_actions,
                         num_kernel=num_kernel)
    out = jax.block_until_ready(out)
    assert out.shape == (bs * seq, n_agents)

    # Tight check: reference fed with the same bf16-quantized activations / weights
    # (bf16 streaming is the only intentional numerical difference).
    q = lambda x: x.astype(jnp.bfloat16).astype(jnp.float32)
    params_q = dict(params)
    for name in ("w_key", "w_agents", "w_action"):
        params_q[name] = q(params[name])
    ref_q = reference(q(states), q(actions), params_q,
                      n_agents=n_agents, n_actions=n_actions, num_kernel=num_kernel)
    np.testing.assert_allclose(np.asarray(out), np.asarray(ref_q), rtol=1e-4, atol=1e-5)

    # Loose check against the pure-f32 reference (bounds the bf16 streaming error).
    ref = reference(states, actions, params,
                    n_agents=n_agents, n_actions=n_actions, num_kernel=num_kernel)
    np.testing.assert_allclose(np.asarray(out), np.asarray(ref), rtol=5e-2, atol=5e-2)

    print("KERNEL_OK")
</pallas_src>

<mosaic_0001>
module attributes {stable_mosaic.version = 11 : i64} {
  func.func @dmaq_si_weight_kernel(%arg0: i32, %arg1: memref<16x16xbf16, #tpu.memory_space<vmem>>, %arg2: memref<16x20xbf16, #tpu.memory_space<vmem>>, %arg3: memref<16x48xbf16, #tpu.memory_space<vmem>>, %arg4: memref<20x16xbf16, #tpu.memory_space<vmem>>, %arg5: memref<1x48xf32, #tpu.memory_space<vmem>>, %arg6: memref<16x128xf32, #tpu.memory_space<vmem>>, %arg7: memref<16x128xf32, #tpu.memory_space<vmem>>) attributes {dimension_semantics = [#tpu.dimension_semantics<parallel>], iteration_bounds = array<i64: 1>, scalar_prefetch = 0 : i64, scratch_operands = 0 : i64, tpu.core_type = #tpu.core_type<tc>, window_params = [{transform_indices = @transform_0, window_bounds = array<i64: 16, 16>}, {transform_indices = @transform_1, window_bounds = array<i64: 16, 20>}, {pipeline_mode = #tpu.pipeline_mode<synchronous>, transform_indices = @transform_2, window_bounds = array<i64: 16, 48>}, {pipeline_mode = #tpu.pipeline_mode<synchronous>, transform_indices = @transform_3, window_bounds = array<i64: 20, 16>}, {pipeline_mode = #tpu.pipeline_mode<synchronous>, transform_indices = @transform_4, window_bounds = array<i64: 1, 48>}, {pipeline_mode = #tpu.pipeline_mode<synchronous>, transform_indices = @transform_5, window_bounds = array<i64: 16, 128>}, {transform_indices = @transform_6, window_bounds = array<i64: 16, 128>}]} {
    %c0 = arith.constant 0 : index
    %c0_0 = arith.constant 0 : index
    %0 = vector.load %arg1[%c0, %c0_0] : memref<16x16xbf16, #tpu.memory_space<vmem>>, vector<16x16xbf16>
    %c0_1 = arith.constant 0 : index
    %c0_2 = arith.constant 0 : index
    %1 = vector.load %arg3[%c0_1, %c0_2] : memref<16x48xbf16, #tpu.memory_space<vmem>>, vector<16x48xbf16>
    %cst = arith.constant dense<0.000000e+00> : vector<16x48xf32>
    %2 = tpu.matmul %0, %1, %cst {dimension_numbers = #tpu.dot_dimension_numbers<[1], [0], [0], [1], [0, 0, 1, 1], [], []>} : vector<16x16xbf16>, vector<16x48xbf16>, vector<16x48xf32> -> vector<16x48xf32>
    %c0_3 = arith.constant 0 : index
    %c0_4 = arith.constant 0 : index
    %3 = vector.load %arg5[%c0_3, %c0_4] : memref<1x48xf32, #tpu.memory_space<vmem>>, vector<1x48xf32>
    %4 = vector.broadcast %3 : vector<1x48xf32> to vector<16x48xf32>
    %5 = arith.addf %2, %4 : vector<16x48xf32>
    %c0_5 = arith.constant 0 : index
    %c0_6 = arith.constant 0 : index
    %6 = vector.load %arg2[%c0_5, %c0_6] : memref<16x20xbf16, #tpu.memory_space<vmem>>, vector<16x20xbf16>
    %c0_7 = arith.constant 0 : index
    %c0_8 = arith.constant 0 : index
    %7 = vector.load %arg4[%c0_7, %c0_8] : memref<20x16xbf16, #tpu.memory_space<vmem>>, vector<20x16xbf16>
    %cst_9 = arith.constant dense<0.000000e+00> : vector<16x16xf32>
    %8 = tpu.matmul %6, %7, %cst_9 {dimension_numbers = #tpu.dot_dimension_numbers<[1], [0], [0], [1], [0, 0, 1, 1], [], []>} : vector<16x20xbf16>, vector<20x16xbf16>, vector<16x16xf32> -> vector<16x16xf32>
    %9 = vector.extract_strided_slice %5 {offsets = [0, 0], sizes = [16, 16], strides = [1, 1]} : vector<16x48xf32> to vector<16x16xf32>
    %10 = vector.extract_strided_slice %5 {offsets = [0, 16], sizes = [16, 16], strides = [1, 1]} : vector<16x48xf32> to vector<16x16xf32>
    %11 = vector.extract_strided_slice %5 {offsets = [0, 32], sizes = [16, 16], strides = [1, 1]} : vector<16x48xf32> to vector<16x16xf32>
    %12 = arith.addf %11, %8 : vector<16x16xf32>
    %cst_10 = arith.constant 2.000000e+01 : f32
    %13 = vector.broadcast %cst_10 : f32 to vector<16x16xf32>
    %14 = arith.cmpf ogt, %9, %13 : vector<16x16xf32>
    %cst_11 = arith.constant 2.000000e+01 : f32
    %15 = vector.broadcast %cst_11 : f32 to vector<16x16xf32>
    %16 = arith.minimumf %9, %15 : vector<16x16xf32>
    %17 = math.exp %16 : vector<16x16xf32>
    %18 = math.log1p %17 : vector<16x16xf32>
    %19 = arith.select %14, %9, %18 : vector<16x16xi1>, vector<16x16xf32>
    %cst_12 = arith.constant 1.000000e-10 : f32
    %20 = vector.broadcast %cst_12 : f32 to vector<16x16xf32>
    %21 = arith.addf %19, %20 : vector<16x16xf32>
    %cst_13 = arith.constant 5.000000e-01 : f32
    %22 = vector.broadcast %cst_13 : f32 to vector<16x16xf32>
    %23 = arith.mulf %22, %10 : vector<16x16xf32>
    %24 = math.tanh %23 : vector<16x16xf32>
    %cst_14 = arith.constant 5.000000e-01 : f32
    %25 = vector.broadcast %cst_14 : f32 to vector<16x16xf32>
    %26 = arith.mulf %25, %24 : vector<16x16xf32>
    %cst_15 = arith.constant 5.000000e-01 : f32
    %27 = vector.broadcast %cst_15 : f32 to vector<16x16xf32>
    %28 = arith.addf %26, %27 : vector<16x16xf32>
    %29 = arith.mulf %21, %28 : vector<16x16xf32>
    %cst_16 = arith.constant 5.000000e-01 : f32
    %30 = vector.broadcast %cst_16 : f32 to vector<16x16xf32>
    %31 = arith.mulf %30, %12 : vector<16x16xf32>
    %32 = math.tanh %31 : vector<16x16xf32>
    %cst_17 = arith.constant 5.000000e-01 : f32
    %33 = vector.broadcast %cst_17 : f32 to vector<16x16xf32>
    %34 = arith.mulf %33, %32 : vector<16x16xf32>
    %cst_18 = arith.constant 5.000000e-01 : f32
    %35 = vector.broadcast %cst_18 : f32 to vector<16x16xf32>
    %36 = arith.addf %34, %35 : vector<16x16xf32>
    %37 = arith.mulf %29, %36 : vector<16x16xf32>
    %c0_19 = arith.constant 0 : index
    %c0_20 = arith.constant 0 : index
    %38 = vector.load %arg6[%c0_19, %c0_20] : memref<16x128xf32, #tpu.memory_space<vmem>>, vector<16x128xf32>
    %cst_21 = arith.constant dense<0.000000e+00> : vector<16x128xf32>
    %39 = tpu.matmul %37, %38, %cst_21 {dimension_numbers = #tpu.dot_dimension_numbers<[1], [0], [0], [1], [0, 0, 1, 1], [], []>} : vector<16x16xf32>, vector<16x128xf32>, vector<16x128xf32> -> vector<16x128xf32>
    %c0_22 = arith.constant 0 : index
    %c0_23 = arith.constant 0 : index
    %40 = vector.load %arg7[%c0_22, %c0_23] : memref<16x128xf32, #tpu.memory_space<vmem>>, vector<16x128xf32>
    tpu.vector_store %arg7[%c0_22, %c0_23], %39 {strides = array<i32>} : memref<16x128xf32, #tpu.memory_space<vmem>>, vector<16x128xf32>,
    return
  }
  func.func @transform_0(%arg0: i32) -> (i32, i32) {
    %c0_i32 = arith.constant 0 : i32
    %c0_i32_0 = arith.constant 0 : i32
    return %arg0, %c0_i32 : i32, i32
  }
  func.func @transform_1(%arg0: i32) -> (i32, i32) {
    %c0_i32 = arith.constant 0 : i32
    %c0_i32_0 = arith.constant 0 : i32
    return %arg0, %c0_i32 : i32, i32
  }
  func.func @transform_2(%arg0: i32) -> (i32, i32) {
    %c0_i32 = arith.constant 0 : i32
    %c0_i32_0 = arith.constant 0 : i32
    %c0_i32_1 = arith.constant 0 : i32
    return %c0_i32, %c0_i32_0 : i32, i32
  }
  func.func @transform_3(%arg0: i32) -> (i32, i32) {
    %c0_i32 = arith.constant 0 : i32
    %c0_i32_0 = arith.constant 0 : i32
    %c0_i32_1 = arith.constant 0 : i32
    return %c0_i32, %c0_i32_0 : i32, i32
  }
  func.func @transform_4(%arg0: i32) -> (i32, i32) {
    %c0_i32 = arith.constant 0 : i32
    %c0_i32_0 = arith.constant 0 : i32
    %c0_i32_1 = arith.constant 0 : i32
    return %c0_i32, %c0_i32_0 : i32, i32
  }
  func.func @transform_5(%arg0: i32) -> (i32, i32) {
    %c0_i32 = arith.constant 0 : i32
    %c0_i32_0 = arith.constant 0 : i32
    %c0_i32_1 = arith.constant 0 : i32
    return %c0_i32, %c0_i32_0 : i32, i32
  }
  func.func @transform_6(%arg0: i32) -> (i32, i32) {
    %c0_i32 = arith.constant 0 : i32
    %c0_i32_0 = arith.constant 0 : i32
    return %arg0, %c0_i32 : i32, i32
  }
}

</mosaic_0001>

<llo_original>
// kernel: tpu_custom_call.1
$region0: #{tpu_custom_call.1}
  #allocation0 [shape = 'u32[]', space=smem, size = 0x4, offset = 0x4, fixed_abs, tag = 'smem constant byte address 0x4 - core index']
  #allocation1 [shape = 'u32[144,128]{1,0:T(1,128)}', space=vmem, size = 0x12000, scoped, tag = 'internal scratch']
  %s0 = inlined_call_operand.vmem [shape: bf16[16,16], index: 0, kind: input, shape index: {}]
  %s1 = inlined_call_operand.hbm [shape: bf16[16,20], index: 1, kind: input, shape index: {}]
  %s2 = inlined_call_operand.hbm [shape: bf16[16,48], index: 2, kind: input, shape index: {}]
  %s3 = inlined_call_operand.vmem [shape: bf16[20,16], index: 3, kind: input, shape index: {}]
  %s4 = inlined_call_operand.vmem [shape: f32[1,48], index: 4, kind: input, shape index: {}]
  %s5 = inlined_call_operand.vmem [shape: f32[16,128], index: 5, kind: input, shape index: {}]
  %s6 = inlined_call_operand.hbm [shape: f32[16,128], index: 6, kind: output, shape index: {}]
  %s7 = sld [smem:[#allocation0]]
  $region42: #{tpu_custom_call.1} parent=0
    _
  %s9 = ssub.s32 1, %s7
  %s10 = scalar_select 0, %s9, %s7
  $region1: #{tpu_custom_call.1} parent=0
    #allocation2 [shape = 'u8[4096]{0}', space=vmem, size = 0x1000, scoped, tag = 'input window, operand 1, single buffered']
    #allocation3 [shape = 's32[1]{0}', space=sflag, size = 0x4, scoped, tag = 'scoped memory for tpu_custom_call.1']
    #allocation4 [shape = 's32[1]{0}', space=sflag, size = 0x4, scoped, tag = 'scoped memory for tpu_custom_call.1']
    #allocation5 [shape = 'u8[4096]{0}', space=vmem, size = 0x1000, scoped, tag = 'input window, operand 2, single buffered']
    #allocation6 [shape = 's32[1]{0}', space=sflag, size = 0x4, scoped, tag = 'scoped memory for tpu_custom_call.1']
    #allocation7 [shape = 'u8[8192]{0}', space=vmem, size = 0x2000, scoped, tag = 'output window, operand 0, single buffered']
    %11 = vsyncpa [#allocation3], 0
    %12 = vsyncpa [#allocation6], 0
    %13 = vsyncpa [#allocation4], 0
    // Predicated region
    $region2: #{tpu_custom_call.1} parent=1 // pred_check
      _
    $region3: #{tpu_custom_call.1} parent=1 // pred_check_branch
      %15 = sbr.rel (0) target = $region5
    $region4: #{tpu_custom_call.1} parent=1 // pred_region
      _
    $region5: #{tpu_custom_call.1} parent=1 // pred_fallthru
      _
    // Predicated region
    $region6: #{tpu_custom_call.1} parent=1 // pred_check
      _
    $region7: #{tpu_custom_call.1} parent=1 // pred_check_branch
      %17 = sbr.rel (0) target = $region9
    $region8: #{tpu_custom_call.1} parent=1 // pred_region
      %s19 = ssub.s32 128, 128
      %20 = vsyncadd [#allocation3], %s19
      %s21 = sshll.u32 [#allocation2], 4
      %s22 = int_to_ptr.vmem [resolvable:$true] %s21
      %27 = dma.hbm_to_vmem [thread:$0]  %s1, 128, %s22, [#allocation3], 64, 64, 4
    $region9: #{tpu_custom_call.1} parent=1 // pred_fallthru
      _
    // Predicated region
    $region10: #{tpu_custom_call.1} parent=1 // pred_check
      _
    $region11: #{tpu_custom_call.1} parent=1 // pred_check_branch
      %29 = sbr.rel (0) target = $region13
    $region12: #{tpu_custom_call.1} parent=1 // pred_region
      %s31 = ssub.s32 128, 128
      %32 = vsyncadd [#allocation6], %s31
      %s33 = sshll.u32 [#allocation5], 4
      %s34 = int_to_ptr.vmem [resolvable:$true] %s33
      %39 = dma.hbm_to_vmem [thread:$0]  %s2, 128, %s34, [#allocation6], 64, 64, 4
    $region13: #{tpu_custom_call.1} parent=1 // pred_fallthru
      _
    // Predicated region
    $region14: #{tpu_custom_call.1} parent=1 // pred_check
      _
    $region15: #{tpu_custom_call.1} parent=1 // pred_check_branch
      %41 = sbr.rel (0) target = $region17
    $region16: #{tpu_custom_call.1} parent=1 // pred_region
      _
    $region17: #{tpu_custom_call.1} parent=1 // pred_fallthru
      _
    // Predicated region
    $region18: #{tpu_custom_call.1} parent=1 // pred_check
      _
    $region19: #{tpu_custom_call.1} parent=1 // pred_check_branch
      %43 = sbr.rel (0) target = $region21
    $region20: #{tpu_custom_call.1} parent=1 // pred_region
      _
    $region21: #{tpu_custom_call.1} parent=1 // pred_fallthru
      _
    // Predicated region
    $region22: #{tpu_custom_call.1} parent=1 // pred_check
      _
    $region23: #{tpu_custom_call.1} parent=1 // pred_check_branch
      %45 = sbr.rel (0) target = $region25
    $region24: #{tpu_custom_call.1} parent=1 // pred_region
      _
    $region25: #{tpu_custom_call.1} parent=1 // pred_fallthru
      _
    // Predicated region
    $region26: #{tpu_custom_call.1} parent=1 // pred_check
      _
    $region27: #{tpu_custom_call.1} parent=1 // pred_check_branch
      %47 = sbr.rel (0) target = $region29
    $region28: #{tpu_custom_call.1} parent=1 // pred_region
      %48 = dma.done [#allocation3], 128
    $region29: #{tpu_custom_call.1} parent=1 // pred_fallthru
      _
    // Predicated region
    $region30: #{tpu_custom_call.1} parent=1 // pred_check
      _
    $region31: #{tpu_custom_call.1} parent=1 // pred_check_branch
      %50 = sbr.rel (0) target = $region33
    $region32: #{tpu_custom_call.1} parent=1 // pred_region
      %51 = dma.done [#allocation6], 128
    $region33: #{tpu_custom_call.1} parent=1 // pred_fallthru
      _
    %v53 = vld [vmem:[%s0] sm:$0xf]
    %v54 = vld [vmem:[%s0 + $0x4] sm:$0xf]
    %v55 = vld [vmem:[#allocation5] sm:$0xf]
    %v56 = vld [vmem:[#allocation5 + $0x4] sm:$0xf]
    %v57 = vld [vmem:[%s4] sm:$0x1]
    %v59 = vlaneseq
    %v60 = vshrl.u32 %v59, 7
    %v61 = vsub.s32 0, %v60
    %v62 = vrot.slane %v57, %v61
    %v66 = vunpack.c.l.b16 %v53
    %v67 = vunpack.c.l.b16 %v54
    %v68 = vpack.c.b16 %v67, %v66
    %v71 = vunpack.c.l.b16 %v55
    %v72 = vunpack.c.l.b16 %v56
    %v73 = vpack.c.b16 %v72, %v71
    %vm75 = vcmask 130048
    %v77 = vsel %vm75, %v68, 0
    %79 = vmatprep.subr.bf16.mxu0 0
    %80 = vmatpush1.bf16.msra.mxu0 0
    %81 = vmatprep.subr.bf16.mxu0 0
    %82 = vmatpush1.bf16.msra.mxu0 0
    %83 = vmatprep.subr.bf16.mxu0 0
    %84 = vmatpush1.bf16.msra.mxu0 0
    %85 = vmatprep.subr.bf16.mxu0 0
    %86 = vmatpush1.bf16.msra.mxu0 0
    %87 = vmatprep.subr.bf16.mxu0 0
    %88 = vmatpush1.bf16.msra.mxu0 0
    %89 = vmatprep.subr.bf16.mxu0 0
    %90 = vmatpush1.bf16.msra.mxu0 0
    %91 = vmatprep.subr.bf16.mxu0 0
    %92 = vmatpush1.bf16.msra.mxu0 0
    %93 = vmatprep.subr.bf16.mxu0 0
    %94 = vmatpush1.bf16.msra.mxu0 %v73
    %95 = vmatprep.subr.bf16.mxu0 0
    %96 = vmatpush2.bf16.msra.mxu0 0
    %97 = vmatprep.subr.bf16.mxu0 0
    %98 = vmatpush2.bf16.msra.mxu0 0
    %99 = vmatprep.subr.bf16.mxu0 0
    %100 = vmatpush2.bf16.msra.mxu0 0
    %101 = vmatprep.subr.bf16.mxu0 0
    %102 = vmatpush2.bf16.msra.mxu0 0
    %103 = vmatprep.subr.bf16.mxu0 0
    %104 = vmatpush2.bf16.msra.mxu0 0
    %105 = vmatprep.subr.bf16.mxu0 0
    %106 = vmatpush2.bf16.msra.mxu0 0
    %107 = vmatprep.subr.bf16.mxu0 0
    %108 = vmatpush2.bf16.msra.mxu0 0
    %109 = vmatprep.subr.bf16.mxu0 0
    %110 = vmatpush2.bf16.msra.mxu0 0
    %111 = vmatprep.mubr.bf16.mxu0 0
    %112 = vmatmul.mubr.bf16.gmra.mxu0 %v77
    %v113 = vpop.f32.mrf.mxu0
    %v114 = vadd.f32 %v62, %v113
    %v115 = vpop.f32.mrf.mxu0
    %v116 = vpop.f32.mrf.mxu0
    %v117 = vadd.f32 %v62, %v116
    %v118 = vpop.f32.mrf.mxu0
    %119 = vdwg.mxu0
    %v120 = vld [vmem:[#allocation2] sm:$0xf]
    %v121 = vld [vmem:[#allocation2 + $0x4] sm:$0xf]
    %v122 = vld [vmem:[%s3] sm:$0xf]
    %v123 = vld [vmem:[%s3 + $0x4] sm:$0xf]
    %v124 = vld [vmem:[%s3 + $0x8] sm:$0x3]
    %v127 = vunpack.c.l.b16 %v120
    %v128 = vunpack.c.l.b16 %v121
    %v129 = vpack.c.b16 %v128, %v127
    %v133 = vunpack.c.l.b16 %v122
    %v134 = vunpack.c.l.b16 %v123
    %v135 = vunpack.c.l.b16 %v124
    %v136 = vpack.c.b16 %v134, %v133
    %v137 = vpack.c.b16 %v135, %v135
    %vm139 = vcmask 162816
    %v141 = vsel %vm139, %v129, 0
    %vm143 = vcmask 1041408
    %v145 = vsel %vm143, %v137, 0
    %147 = vmatprep.subr.bf16.mxu0 0
    %148 = vmatpush1.bf16.msra.mxu0 0
    %149 = vmatprep.subr.bf16.mxu0 0
    %150 = vmatpush1.bf16.msra.mxu0 0
    %151 = vmatprep.subr.bf16.mxu0 0
    %152 = vmatpush1.bf16.msra.mxu0 0
    %153 = vmatprep.subr.bf16.mxu0 0
    %154 = vmatpush1.bf16.msra.mxu0 0
    %155 = vmatprep.subr.bf16.mxu0 0
    %156 = vmatpush1.bf16.msra.mxu0 0
    %157 = vmatprep.subr.bf16.mxu0 0
    %158 = vmatpush1.bf16.msra.mxu0 0
    %159 = vmatprep.subr.bf16.mxu0 0
    %160 = vmatpush1.bf16.msra.mxu0 %v145
    %161 = vmatprep.subr.bf16.mxu0 0
    %162 = vmatpush1.bf16.msra.mxu0 %v136
    %163 = vmatprep.subr.bf16.mxu0 0
    %164 = vmatpush2.bf16.msra.mxu0 0
    %165 = vmatprep.subr.bf16.mxu0 0
    %166 = vmatpush2.bf16.msra.mxu0 0
    %167 = vmatprep.subr.bf16.mxu0 0
    %168 = vmatpush2.bf16.msra.mxu0 0
    %169 = vmatprep.subr.bf16.mxu0 0
    %170 = vmatpush2.bf16.msra.mxu0 0
    %171 = vmatprep.subr.bf16.mxu0 0
    %172 = vmatpush2.bf16.msra.mxu0 0
    %173 = vmatprep.subr.bf16.mxu0 0
    %174 = vmatpush2.bf16.msra.mxu0 0
    %175 = vmatprep.subr.bf16.mxu0 0
    %176 = vmatpush2.bf16.msra.mxu0 0
    %177 = vmatprep.subr.bf16.mxu0 0
    %178 = vmatpush2.bf16.msra.mxu0 0
    %179 = vmatprep.mubr.bf16.mxu0 0
    %180 = vmatmul.mubr.bf16.gmra.mxu0 %v141
    %v181 = vpop.f32.mrf.mxu0
    %v182 = vadd.f32 0.0, %v181
    %v183 = vpop.f32.mrf.mxu0
    %v184 = vpop.f32.mrf.mxu0
    %v185 = vadd.f32 0.0, %v184
    %v186 = vpop.f32.mrf.mxu0
    %187 = vdwg.mxu0
    %190 = vrot.lane.b32.xlu0 %v182, 32
    %v191 = vpop.permute.xlu0 %190
    %192 = vrot.lane.b32.xlu0 %v185, 32
    %v193 = vpop.permute.xlu0 %192
    %v196 = vadd.f32 %v114, %v191
    %v197 = vadd.f32 %v117, %v193
    %vm198 = vcmp.gt.f32.partialorder %v114, 20.0
    %vm199 = vcmp.gt.f32.partialorder %v117, 20.0
    %v200 = vmin.f32 %v114, 20.0
    %v201 = vmin.f32 %v117, 20.0
    %v202 = vmul.f32 %v200, 1.442695
    %v203 = vpow.pop %v202
    %v204 = vmul.f32 %v201, 1.442695
    %v205 = vpow.pop %v204
    %v206 = vadd.f32 %v203, 1.0
    %v207 = vlog2.pop %v206
    %v208 = vmul.f32 %v207, 0.6931472
    %v209 = vmul.f32 -0.5, %v203
    %v210 = vadd.f32 %v209, 1.0
    %v211 = vmul.f32 %v210, %v203
    %v212 = vand.u32 2147483647, %v203
    %vm213 = vcmp.lt.f32.partialorder %v212, 0.0004427343
    %v214 = vsel %vm213, %v211, %v208
    %v215 = vadd.f32 %v205, 1.0
    %v216 = vlog2.pop %v215
    %v217 = vmul.f32 %v216, 0.6931472
    %v218 = vmul.f32 -0.5, %v205
    %v219 = vadd.f32 %v218, 1.0
    %v220 = vmul.f32 %v219, %v205
    %v221 = vand.u32 2147483647, %v205
    %vm222 = vcmp.lt.f32.partialorder %v221, 0.0004427343
    %v223 = vsel %vm222, %v220, %v217
    %v224 = vsel %vm198, %v114, %v214
    %v225 = vsel %vm199, %v117, %v223
    %v226 = vadd.f32 %v224, 1e-10
    %v227 = vadd.f32 %v225, 1e-10
    %v228 = vmul.f32 %v114, 0.5
    %v229 = vmul.f32 %v117, 0.5
    %v230 = vtanh.pop %v228
    %v231 = vtanh.pop %v229
    %v232 = vmul.f32 %v230, 0.5
    %v233 = vmul.f32 %v231, 0.5
    %v234 = vadd.f32 %v232, 0.5
    %v235 = vadd.f32 %v233, 0.5
    %238 = vrot.lane.b32.xlu0 %v234, 112
    %v239 = vpop.permute.xlu0 %238
    %240 = vrot.lane.b32.xlu0 %v235, 112
    %v241 = vpop.permute.xlu0 %240
    %v244 = vmul.f32 %v226, %v239
    %v245 = vmul.f32 %v227, %v241
    %v246 = vmul.f32 %v196, 0.5
    %v247 = vmul.f32 %v197, 0.5
    %v248 = vtanh.pop %v246
    %v249 = vtanh.pop %v247
    %v250 = vmul.f32 %v248, 0.5
    %v251 = vmul.f32 %v249, 0.5
    %v252 = vadd.f32 %v250, 0.5
    %v253 = vadd.f32 %v251, 0.5
    %256 = vrot.lane.b32.xlu0 %v252, 96
    %v257 = vpop.permute.xlu0 %256
    %258 = vrot.lane.b32.xlu0 %v253, 96
    %v259 = vpop.permute.xlu0 %258
    %v262 = vmul.f32 %v244, %v257
    %v263 = vmul.f32 %v245, %v259
    %v264 = vld [vmem:[%s5] sm:$0xff]
    %v265 = vld [vmem:[%s5 + $0x8] sm:$0xff]
    %v267 = vsel %vm75, %v262, 0
    %v270 = vsel %vm75, %v263, 0
    %272 = vmatprep.subr.mxu0 0.0
    %273 = vmatpush1.msra.mxu0 0.0
    %274 = vmatprep.subr.mxu0 0.0
    %275 = vmatpush1.msra.mxu0 0.0
    %276 = vmatprep.subr.mxu0 0.0
    %277 = vmatpush1.msra.mxu0 0.0
    %278 = vmatprep.subr.mxu0 0.0
    %279 = vmatpush1.msra.mxu0 0.0
    %280 = vmatprep.subr.mxu0 0.0
    %281 = vmatpush1.msra.mxu0 0.0
    %282 = vmatprep.subr.mxu0 0.0
    %283 = vmatpush1.msra.mxu0 0.0
    %284 = vmatprep.subr.mxu0 0.0
    %285 = vmatpush1.msra.mxu0 0.0
    %286 = vmatprep.subr.mxu0 0.0
    %287 = vmatpush1.msra.mxu0 0.0
    %288 = vmatprep.subr.mxu0 0.0
    %289 = vmatpush1.msra.mxu0 0.0
    %290 = vmatprep.subr.mxu0 0.0
    %291 = vmatpush1.msra.mxu0 0.0
    %292 = vmatprep.subr.mxu0 0.0
    %293 = vmatpush1.msra.mxu0 0.0
    %294 = vmatprep.subr.mxu0 0.0
    %295 = vmatpush1.msra.mxu0 0.0
    %296 = vmatprep.subr.mxu0 0.0
    %297 = vmatpush1.msra.mxu0 0.0
    %298 = vmatprep.subr.mxu0 0.0
    %299 = vmatpush1.msra.mxu0 0.0
    %300 = vmatprep.subr.mxu0 0.0
    %301 = vmatpush1.msra.mxu0 %v265
    %302 = vmatprep.subr.mxu0 0.0
    %303 = vmatpush1.msra.mxu0 %v264
    %304 = vmatprep.subr.mxu0 0.0
    %305 = vmatpush2.msra.mxu0 0.0
    %306 = vmatprep.subr.mxu0 0.0
    %307 = vmatpush2.msra.mxu0 0.0
    %308 = vmatprep.subr.mxu0 0.0
    %309 = vmatpush2.msra.mxu0 0.0
    %310 = vmatprep.subr.mxu0 0.0
    %311 = vmatpush2.msra.mxu0 0.0
    %312 = vmatprep.subr.mxu0 0.0
    %313 = vmatpush2.msra.mxu0 0.0
    %314 = vmatprep.subr.mxu0 0.0
    %315 = vmatpush2.msra.mxu0 0.0
    %316 = vmatprep.subr.mxu0 0.0
    %317 = vmatpush2.msra.mxu0 0.0
    %318 = vmatprep.subr.mxu0 0.0
    %319 = vmatpush2.msra.mxu0 0.0
    %320 = vmatprep.subr.mxu0 0.0
    %321 = vmatpush2.msra.mxu0 0.0
    %322 = vmatprep.subr.mxu0 0.0
    %323 = vmatpush2.msra.mxu0 0.0
    %324 = vmatprep.subr.mxu0 0.0
    %325 = vmatpush2.msra.mxu0 0.0
    %326 = vmatprep.subr.mxu0 0.0
    %327 = vmatpush2.msra.mxu0 0.0
    %328 = vmatprep.subr.mxu0 0.0
    %329 = vmatpush2.msra.mxu0 0.0
    %330 = vmatprep.subr.mxu0 0.0
    %331 = vmatpush2.msra.mxu0 0.0
    %332 = vmatprep.subr.mxu0 0.0
    %333 = vmatpush2.msra.mxu0 0.0
    %334 = vmatprep.subr.mxu0 0.0
    %335 = vmatpush2.msra.mxu0 0.0
    %336 = vmatprep.mubr.f32.mxu0 0.0
    %337 = vmatmul.mubr.f32.gmra.mxu0 %v267
    %v338 = vpop.f32.mrf.mxu0
    %v339 = vadd.f32 0.0, %v338
    %v340 = vpop.f32.mrf.mxu0
    %341 = vmatprep.mubr.f32.mxu0 0.0
    %342 = vmatmul.mubr.f32.gmra.mxu0 %v270
    %v343 = vpop.f32.mrf.mxu0
    %v344 = vadd.f32 0.0, %v343
    %v345 = vpop.f32.mrf.mxu0
    %346 = vdwg.mxu0
    %347 = vst [vmem:[#allocation7] sm:$0xff] %v339
    %348 = vst [vmem:[#allocation7 + $0x8] sm:$0xff] %v344
    // Predicated region
    $region34: #{tpu_custom_call.1} parent=1 // pred_check
      _
    $region35: #{tpu_custom_call.1} parent=1 // pred_check_branch
      %350 = sbr.rel (0) target = $region37
    $region36: #{tpu_custom_call.1} parent=1 // pred_region
      %s352 = ssub.s32 256, 256
      %353 = vsyncadd [#allocation4], %s352
      %s354 = sshll.u32 [#allocation7], 4
      %s355 = int_to_ptr.vmem [resolvable:$true] %s354
      %360 = dma.vmem_to_hbm [thread:$0]  %s355, 256, %s6, [#allocation4], 128, 128, 8
    $region37: #{tpu_custom_call.1} parent=1 // pred_fallthru
      _
    // Predicated region
    $region38: #{tpu_custom_call.1} parent=1 // pred_check
      _
    $region39: #{tpu_custom_call.1} parent=1 // pred_check_branch
      %362 = sbr.rel (0) target = $region41
    $region40: #{tpu_custom_call.1} parent=1 // pred_region
      %363 = dma.done [#allocation4], 256
    $region41: #{tpu_custom_call.1} parent=1 // pred_fallthru
      _
    %364 = vsyncpa [#allocation3], 1
    %365 = vsyncpa [#allocation6], 1
    %366 = vsyncpa [#allocation4], 1

</llo_original>
